<compile_context>
chip_gen: v7x
topology: tpu7x:2x2x1
jax: 0.10.0
libtpu: 0.0.40
codegen_flags: <defaults>
</compile_context>

<pallas_src>
import functools

import jax
import jax.numpy as jnp
from jax.experimental import pallas as pl
from jax.experimental.pallas import tpu as pltpu


def _fm_kernel(x_ref, vw_ref, v2_ref, b_ref, o_ref):
    k = v2_ref.shape[1]

    x = x_ref[...]                                    # (TB, D)   streamed tile
    vw = vw_ref[...]                                  # (D, K+1)  [V | w], VMEM-resident
    v2 = v2_ref[...]                                  # (D, K)    V*V,     VMEM-resident
    b = b_ref[0, 0]                                   # scalar bias from SMEM

    # One MXU pass gives both x@V and x@w; a second gives (x*x)@(V*V).
    r1 = jnp.dot(x, vw, preferred_element_type=jnp.float32)         # (TB, K+1)
    x2v2 = jnp.dot(x * x, v2, preferred_element_type=jnp.float32)   # (TB, K)

    xv = r1[:, :k]                                    # (TB, K)
    linear = r1[:, k:k + 1] + b                       # (TB, 1)
    interaction = 0.5 * jnp.sum(xv * xv - x2v2, axis=1, keepdims=True)

    o_ref[...] = jax.nn.sigmoid(linear + interaction).astype(o_ref.dtype)


def _round_up(a, m):
    return ((a + m - 1) // m) * m


@functools.partial(jax.jit, static_argnames=("block_b",))
def fm_forward(x, w, b, v, *, block_b=None):
    """FM forward. x: (B, D); w: (D, 1); b: (1, 1); v: (D, K) -> (B, 1)."""
    B, D = x.shape
    K = v.shape[1]

    if block_b is None:
        block_b = min(512, _round_up(B, 8))
    block_b = max(8, _round_up(block_b, 8))
    Bp = _round_up(B, block_b)
    num_tiles = Bp // block_b

    x_p = x if Bp == B else jnp.pad(x, ((0, Bp - B), (0, 0)))

    # Loop-invariant operands, built once in the wrapper (not per grid step).
    vw = jnp.concatenate([v, w.reshape(D, 1)], axis=1).astype(jnp.float32)  # (D, K+1)
    v2 = (v * v).astype(jnp.float32)                                        # (D, K)
    b2d = jnp.asarray(b, jnp.float32).reshape(1, 1)

    # VMEM budget: double-buffered x tile + resident RHS + (TB, K) intermediates.
    est_bytes = 4 * (2 * block_b * D + D * (2 * K + 1) + 6 * block_b * (K + 2))
    vmem_limit = int(min(max(2 * est_bytes, 32 * 1024 * 1024), 64 * 1024 * 1024))

    cost = pl.CostEstimate(
        flops=2 * Bp * D * (2 * K + 1) + 5 * Bp * K,
        transcendentals=Bp,
        bytes_accessed=4 * (Bp * D + D * (2 * K + 1) + Bp + 1),
    )

    out = pl.pallas_call(
        _fm_kernel,
        out_shape=jax.ShapeDtypeStruct((Bp, 1), jnp.float32),
        grid_spec=pltpu.PrefetchScalarGridSpec(
            num_scalar_prefetch=0,
            grid=(num_tiles,),
            in_specs=[
                pl.BlockSpec((block_b, D), lambda i: (i, 0)),       # x: streamed per tile
                pl.BlockSpec((D, K + 1), lambda i: (0, 0)),         # [V | w]: resident
                pl.BlockSpec((D, K), lambda i: (0, 0)),             # V*V: resident
                pl.BlockSpec(memory_space=pltpu.MemorySpace.SMEM),  # bias: SMEM scalar
            ],
            out_specs=pl.BlockSpec((block_b, 1), lambda i: (i, 0)),
        ),
        compiler_params=pltpu.CompilerParams(
            dimension_semantics=("parallel",),
            vmem_limit_bytes=vmem_limit,
        ),
        cost_estimate=cost,
    )(x_p, vw, v2, b2d)

    return out[:B]


def fm_reference(x, w, b, v):
    linear = x @ w + b[0, 0]
    xv = x @ v
    x2v2 = (x * x) @ (v * v)
    inter = 0.5 * jnp.sum(xv * xv - x2v2, axis=1, keepdims=True)
    return jax.nn.sigmoid(linear + inter)


if __name__ == "__main__":
    key = jax.random.PRNGKey(0)
    B, D, K = 12, 32, 16   # batch, input_dim, factorization rank (small demo shapes)

    k_x, k_w, k_b, k_v = jax.random.split(key, 4)
    x = jax.random.normal(k_x, (B, D), dtype=jnp.float32)

    # Deterministic parameter init (mimics nn.Linear + 0.01 * randn for V).
    w = jax.random.normal(k_w, (D, 1), dtype=jnp.float32) * (1.0 / jnp.sqrt(D))
    b = jax.random.normal(k_b, (1, 1), dtype=jnp.float32) * (1.0 / jnp.sqrt(D))
    v = jax.random.normal(k_v, (D, K), dtype=jnp.float32) * 0.01

    # block_b=8 -> padded batch 16, grid=(2,): exercises tiling + remainder padding.
    out = fm_forward(x, w, b, v, block_b=8)
    out = jax.block_until_ready(out)

    ref = fm_reference(x, w, b, v)
    assert out.shape == (B, 1), out.shape
    assert jnp.allclose(out, ref, atol=1e-5, rtol=1e-5), (out, ref)

    print("KERNEL_OK")
</pallas_src>

<mosaic_0001>
module attributes {stable_mosaic.version = 11 : i64} {
  func.func @_fm_kernel(%arg0: i32, %arg1: memref<8x32xf32, #tpu.memory_space<vmem>>, %arg2: memref<32x17xf32, #tpu.memory_space<vmem>>, %arg3: memref<32x16xf32, #tpu.memory_space<vmem>>, %arg4: memref<1x1xf32, #tpu.memory_space<smem>>, %arg5: memref<8x1xf32, #tpu.memory_space<vmem>>) attributes {dimension_semantics = [#tpu.dimension_semantics<parallel>], iteration_bounds = array<i64: 2>, scalar_prefetch = 0 : i64, scratch_operands = 0 : i64, tpu.core_type = #tpu.core_type<tc>, window_params = [{transform_indices = @transform_0, window_bounds = array<i64: 8, 32>}, {pipeline_mode = #tpu.pipeline_mode<synchronous>, transform_indices = @transform_1, window_bounds = array<i64: 32, 17>}, {pipeline_mode = #tpu.pipeline_mode<synchronous>, transform_indices = @transform_2, window_bounds = array<i64: 32, 16>}, {transform_indices = @transform_3, window_bounds = array<i64: 1, 1>}, {transform_indices = @transform_4, window_bounds = array<i64: 8, 1>}]} {
    %c0 = arith.constant 0 : index
    %c0_0 = arith.constant 0 : index
    %0 = vector.load %arg1[%c0, %c0_0] : memref<8x32xf32, #tpu.memory_space<vmem>>, vector<8x32xf32>
    %c0_1 = arith.constant 0 : index
    %c0_2 = arith.constant 0 : index
    %1 = vector.load %arg2[%c0_1, %c0_2] : memref<32x17xf32, #tpu.memory_space<vmem>>, vector<32x17xf32>
    %c0_3 = arith.constant 0 : index
    %c0_4 = arith.constant 0 : index
    %2 = vector.load %arg3[%c0_3, %c0_4] : memref<32x16xf32, #tpu.memory_space<vmem>>, vector<32x16xf32>
    %c0_5 = arith.constant 0 : index
    %c0_6 = arith.constant 0 : index
    %3 = memref.load %arg4[%c0_5, %c0_6] : memref<1x1xf32, #tpu.memory_space<smem>>
    %cst = arith.constant dense<0.000000e+00> : vector<8x17xf32>
    %4 = tpu.matmul %0, %1, %cst {dimension_numbers = #tpu.dot_dimension_numbers<[1], [0], [0], [1], [0, 0, 1, 1], [], []>} : vector<8x32xf32>, vector<32x17xf32>, vector<8x17xf32> -> vector<8x17xf32>
    %5 = arith.mulf %0, %0 : vector<8x32xf32>
    %cst_7 = arith.constant dense<0.000000e+00> : vector<8x16xf32>
    %6 = tpu.matmul %5, %2, %cst_7 {dimension_numbers = #tpu.dot_dimension_numbers<[1], [0], [0], [1], [0, 0, 1, 1], [], []>} : vector<8x32xf32>, vector<32x16xf32>, vector<8x16xf32> -> vector<8x16xf32>
    %7 = vector.extract_strided_slice %4 {offsets = [0, 0], sizes = [8, 16], strides = [1, 1]} : vector<8x17xf32> to vector<8x16xf32>
    %8 = vector.extract_strided_slice %4 {offsets = [0, 16], sizes = [8, 1], strides = [1, 1]} : vector<8x17xf32> to vector<8x1xf32>
    %9 = vector.broadcast %3 : f32 to vector<8x1xf32>
    %10 = arith.addf %8, %9 : vector<8x1xf32>
    %11 = arith.mulf %7, %7 : vector<8x16xf32>
    %12 = arith.subf %11, %6 : vector<8x16xf32>
    %cst_8 = arith.constant dense<0.000000e+00> : vector<8xf32>
    %13 = vector.multi_reduction <add>, %12, %cst_8 [1] : vector<8x16xf32> to vector<8xf32>
    %14 = vector.shape_cast %13 : vector<8xf32> to vector<8x1xf32>
    %cst_9 = arith.constant 5.000000e-01 : f32
    %15 = vector.broadcast %cst_9 : f32 to vector<8x1xf32>
    %16 = arith.mulf %15, %14 : vector<8x1xf32>
    %17 = arith.addf %10, %16 : vector<8x1xf32>
    %18 = arith.negf %17 : vector<8x1xf32>
    %19 = math.exp %18 : vector<8x1xf32>
    %cst_10 = arith.constant 1.000000e+00 : f32
    %20 = vector.broadcast %cst_10 : f32 to vector<8x1xf32>
    %21 = arith.addf %20, %19 : vector<8x1xf32>
    %22 = arith.divf %20, %21 : vector<8x1xf32>
    %c0_11 = arith.constant 0 : index
    %c0_12 = arith.constant 0 : index
    %23 = vector.load %arg5[%c0_11, %c0_12] : memref<8x1xf32, #tpu.memory_space<vmem>>, vector<8x1xf32>
    tpu.vector_store %arg5[%c0_11, %c0_12], %22 {strides = array<i32>} : memref<8x1xf32, #tpu.memory_space<vmem>>, vector<8x1xf32>,
    return
  }
  func.func @transform_0(%arg0: i32) -> (i32, i32) {
    %c0_i32 = arith.constant 0 : i32
    %c0_i32_0 = arith.constant 0 : i32
    return %arg0, %c0_i32 : i32, i32
  }
  func.func @transform_1(%arg0: i32) -> (i32, i32) {
    %c0_i32 = arith.constant 0 : i32
    %c0_i32_0 = arith.constant 0 : i32
    %c0_i32_1 = arith.constant 0 : i32
    return %c0_i32, %c0_i32_0 : i32, i32
  }
  func.func @transform_2(%arg0: i32) -> (i32, i32) {
    %c0_i32 = arith.constant 0 : i32
    %c0_i32_0 = arith.constant 0 : i32
    %c0_i32_1 = arith.constant 0 : i32
    return %c0_i32, %c0_i32_0 : i32, i32
  }
  func.func @transform_3(%arg0: i32) -> (i32, i32) {
    %c0_i32 = arith.constant 0 : i32
    %c0_i32_0 = arith.constant 0 : i32
    %c0_i32_1 = arith.constant 0 : i32
    return %c0_i32, %c0_i32_0 : i32, i32
  }
  func.func @transform_4(%arg0: i32) -> (i32, i32) {
    %c0_i32 = arith.constant 0 : i32
    %c0_i32_0 = arith.constant 0 : i32
    return %arg0, %c0_i32 : i32, i32
  }
}

</mosaic_0001>

<llo_original>
// kernel: mul.1
$region0: #{mul.1}
  #allocation0 [shape = 's32[1]{0}', space=sflag, size = 0x4, scoped, tag = 'scoped memory for mul.1']
  %s0 = inlined_call_operand.vmem [shape: f32[32,16], index: 0, kind: input, shape index: {}, may-alias: {0,1}]
  %s1 = inlined_call_operand.vmem [shape: f32[32,16], index: 1, kind: input, shape index: {}, may-alias: {0,1}]
  %s2 = inlined_call_operand.vmem [shape: f32[32,16], index: 2, kind: output, shape index: {}]
  %v3 = vld [vmem:[%s0] sm:$0xff]
  %v4 = vld [vmem:[%s1] sm:$0xff]
  %5 = xla_tuple %v3, %v4
  %6 = xla_tuple %5
  %v7 = vmul.f32 %v3, %v4
  %8 = xla_tuple %v7
  %9 = vst [vmem:[%s2] sm:$0xff] %v7
  %s10 = scalar_lea.vmem %s0, 8
  %v11 = vld [vmem:[%s10] sm:$0xff]
  %s12 = scalar_lea.vmem %s1, 8
  %v13 = vld [vmem:[%s12] sm:$0xff]
  %14 = xla_tuple %v11, %v13
  %15 = xla_tuple %14
  %v16 = vmul.f32 %v11, %v13
  %17 = xla_tuple %v16
  %s18 = scalar_lea.vmem %s2, 8
  %19 = vst [vmem:[%s18] sm:$0xff] %v16

// kernel: fm_forward.1
$region0: #{fm_forward.1}
  #allocation0 [shape = 'u32[]', space=smem, size = 0x4, offset = 0x4, fixed_abs, tag = 'smem constant byte address 0x4 - core index']
  #allocation1 [shape = 'u32[144,128]{1,0:T(1,128)}', space=vmem, size = 0x12000, scoped, tag = 'internal scratch']
  #allocation2 [shape = 'f32[1,1]{1,0:T(1,128)S(6)}', space=smem, size = 0x200, scoped, tag = 'scoped memory for fm_forward.1']
  %s0 = inlined_call_operand.vmem [shape: f32[16,32], index: 0, kind: input, shape index: {}]
  %s1 = inlined_call_operand.vmem [shape: f32[32,17], index: 1, kind: input, shape index: {}]
  %s2 = inlined_call_operand.vmem [shape: f32[32,16], index: 2, kind: input, shape index: {}]
  %s3 = inlined_call_operand.<no memory space> [shape: f32[1,1], index: 3, kind: input, shape index: {}]
  %s4 = inlined_call_operand.vmem [shape: f32[16,1], index: 4, kind: output, shape index: {}]
  %s5 = sld [smem:[#allocation0]]
  $region49: #{fm_forward.1} parent=0
    _
  %s7 = ssub.s32 1, %s5
  %s8 = scalar_select 0, %s7, %s5
  %9 = sst [smem:[#allocation2]] %s3
  loop: start=0, step=1, limit=4
  $region2: #{fm_forward.1} parent=0 // loop_pre_header
    _
  $region3: #{fm_forward.1} parent=0 // loop_header
    %s11 = sphi 0, %s15
    %p12 = scmp.ge.s32.totalorder %s11, 4
    %s21 = sphi 0, %s23
    %s24 = sphi 0, %s21
    %s25 = sphi 0, %s24
    %s41 = sphi 0, %s25
    %s45 = sphi 0, %s45
    %s47 = sphi 0, %s45
    %s48 = sphi 0, %s47
    %s62 = sphi 0, %s48
    %s66 = sphi 0, %s66
    %s68 = sphi 0, %s66
    %s69 = sphi 0, %s68
    %s83 = sphi 0, %s69
    %s87 = sphi 0, %s87
    %s89 = sphi 0, %s87
    %s90 = sphi 0, %s89
    %s104 = sphi 0, %s90
    %s110 = sphi 0, %s112
    %s113 = sphi 0, %s110
    %s114 = sphi 0, %s113
    %s130 = sphi 0, %s114
  $region4: #{fm_forward.1} parent=0 // loop_header_branch
    %14 = sbr.rel (%p12) target = $region8
  $region5: #{fm_forward.1} parent=0 // loop_body
    %s16 = ssub.s32 %s11, 1
    %s17 = ssub.s32 %s11, 2
    %s18 = sadd.s32 %s11, 1
    %s19 = ssub.s32 %s11, %s18
    %p20 = scmp.eq.s32.totalorder %s19, 0
    %s22 = sadd.s32 %s21, 1
    %s23 = scalar_select %p20, %s21, %s22
    %p26 = pneg %p20
    %p27 = scmp.eq.s32.totalorder %s11, 1
    %p28 = por %p26, %p27
    %p29 = scmp.ne.s32.totalorder %s21, %s24
    %p30 = scmp.eq.s32.totalorder %s11, 0
    %p31 = por %p29, %p30
    %p32 = scmp.ne.s32.totalorder %s21, %s24
    %p33 = scmp.eq.s32.totalorder %s16, 1
    %p34 = por %p32, %p33
    %p35 = scmp.ne.s32.totalorder %s24, %s25
    %p36 = scmp.eq.s32.totalorder %s16, 0
    %p37 = por %p35, %p36
    %p38 = scmp.ne.s32.totalorder %s24, %s25
    %p39 = scmp.eq.s32.totalorder %s17, 1
    %p40 = por %p38, %p39
    %p42 = scmp.ne.s32.totalorder %s25, %s41
    %p43 = scmp.eq.s32.totalorder %s17, 0
    %p44 = por %p42, %p43
    %s46 = sadd.s32 %s45, 1
    %p49 = scmp.eq.s32.totalorder %s11, 1
    %p50 = scmp.ne.s32.totalorder %s45, %s47
    %p51 = scmp.eq.s32.totalorder %s11, 0
    %p52 = por %p50, %p51
    %p53 = scmp.ne.s32.totalorder %s45, %s47
    %p54 = scmp.eq.s32.totalorder %s16, 1
    %p55 = por %p53, %p54
    %p56 = scmp.ne.s32.totalorder %s47, %s48
    %p57 = scmp.eq.s32.totalorder %s16, 0
    %p58 = por %p56, %p57
    %p59 = scmp.ne.s32.totalorder %s47, %s48
    %p60 = scmp.eq.s32.totalorder %s17, 1
    %p61 = por %p59, %p60
    %p63 = scmp.ne.s32.totalorder %s48, %s62
    %p64 = scmp.eq.s32.totalorder %s17, 0
    %p65 = por %p63, %p64
    %s67 = sadd.s32 %s66, 1
    %p70 = scmp.eq.s32.totalorder %s11, 1
    %p71 = scmp.ne.s32.totalorder %s66, %s68
    %p72 = scmp.eq.s32.totalorder %s11, 0
    %p73 = por %p71, %p72
    %p74 = scmp.ne.s32.totalorder %s66, %s68
    %p75 = scmp.eq.s32.totalorder %s16, 1
    %p76 = por %p74, %p75
    %p77 = scmp.ne.s32.totalorder %s68, %s69
    %p78 = scmp.eq.s32.totalorder %s16, 0
    %p79 = por %p77, %p78
    %p80 = scmp.ne.s32.totalorder %s68, %s69
    %p81 = scmp.eq.s32.totalorder %s17, 1
    %p82 = por %p80, %p81
    %p84 = scmp.ne.s32.totalorder %s69, %s83
    %p85 = scmp.eq.s32.totalorder %s17, 0
    %p86 = por %p84, %p85
    %s88 = sadd.s32 %s87, 1
    %p91 = scmp.eq.s32.totalorder %s11, 1
    %p92 = scmp.ne.s32.totalorder %s87, %s89
    %p93 = scmp.eq.s32.totalorder %s11, 0
    %p94 = por %p92, %p93
    %p95 = scmp.ne.s32.totalorder %s87, %s89
    %p96 = scmp.eq.s32.totalorder %s16, 1
    %p97 = por %p95, %p96
    %p98 = scmp.ne.s32.totalorder %s89, %s90
    %p99 = scmp.eq.s32.totalorder %s16, 0
    %p100 = por %p98, %p99
    %p101 = scmp.ne.s32.totalorder %s89, %s90
    %p102 = scmp.eq.s32.totalorder %s17, 1
    %p103 = por %p101, %p102
    %p105 = scmp.ne.s32.totalorder %s90, %s104
    %p106 = scmp.eq.s32.totalorder %s17, 0
    %p107 = por %p105, %p106
    %s108 = ssub.s32 %s11, %s18
    %p109 = scmp.eq.s32.totalorder %s108, 0
    %s111 = sadd.s32 %s110, 1
    %s112 = scalar_select %p109, %s110, %s111
    %p115 = pneg %p109
    %p116 = scmp.eq.s32.totalorder %s11, 1
    %p117 = por %p115, %p116
    %p118 = scmp.ne.s32.totalorder %s110, %s113
    %p119 = scmp.eq.s32.totalorder %s11, 0
    %p120 = por %p118, %p119
    %p121 = scmp.ne.s32.totalorder %s110, %s113
    %p122 = scmp.eq.s32.totalorder %s16, 1
    %p123 = por %p121, %p122
    %p124 = scmp.ne.s32.totalorder %s113, %s114
    %p125 = scmp.eq.s32.totalorder %s16, 0
    %p126 = por %p124, %p125
    %p127 = scmp.ne.s32.totalorder %s113, %s114
    %p128 = scmp.eq.s32.totalorder %s17, 1
    %p129 = por %p127, %p128
    %p131 = scmp.ne.s32.totalorder %s114, %s130
    %p132 = scmp.eq.s32.totalorder %s17, 0
    %p133 = por %p131, %p132
    %p134 = scmp.le.s32.totalorder 1, %s11
    %p135 = scmp.lt.s32.totalorder %s11, 3
    %p136 = pnand %p134, %p135
    %p137 = pneg %p136
    // Predicated region
    $region9: #{fm_forward.1} parent=5 // pred_check
      _
    $region10: #{fm_forward.1} parent=5 // pred_check_branch
      %139 = sbr.rel (%p136) target = $region12
    $region11: #{fm_forward.1} parent=5 // pred_region
      %s140 = ssub.s32 %s11, 1
      // Predicated region
      $region13: #{fm_forward.1} parent=11 // pred_check
        %p141 = pneg %p58
      $region14: #{fm_forward.1} parent=11 // pred_check_branch
        %143 = sbr.rel (%p141) target = $region16
      $region15: #{fm_forward.1} parent=11 // pred_region
        _
      $region16: #{fm_forward.1} parent=11 // pred_fallthru
        _
      // Predicated region
      $region17: #{fm_forward.1} parent=11 // pred_check
        %p144 = pneg %p79
      $region18: #{fm_forward.1} parent=11 // pred_check_branch
        %146 = sbr.rel (%p144) target = $region20
      $region19: #{fm_forward.1} parent=11 // pred_region
        _
      $region20: #{fm_forward.1} parent=11 // pred_fallthru
        _
      // Predicated region
      $region21: #{fm_forward.1} parent=11 // pred_check
        %p147 = pneg %p100
      $region22: #{fm_forward.1} parent=11 // pred_check_branch
        %149 = sbr.rel (%p147) target = $region24
      $region23: #{fm_forward.1} parent=11 // pred_region
        _
      $region24: #{fm_forward.1} parent=11 // pred_fallthru
        _
    $region12: #{fm_forward.1} parent=5 // pred_fallthru
      _
    %p150 = scmp.lt.s32.totalorder %s11, 2
    // Predicated region
    $region25: #{fm_forward.1} parent=5 // pred_check
      %p151 = pneg %p150
    $region26: #{fm_forward.1} parent=5 // pred_check_branch
      %153 = sbr.rel (%p151) target = $region28
    $region27: #{fm_forward.1} parent=5 // pred_region
      // Predicated region
      $region29: #{fm_forward.1} parent=27 // pred_check
        %p154 = pneg %p31
      $region30: #{fm_forward.1} parent=27 // pred_check_branch
        %156 = sbr.rel (%p154) target = $region32
      $region31: #{fm_forward.1} parent=27 // pred_region
        %p157 = scmp.lt.s32.totalorder %s11, 1
        %s158 = scalar_select %p157, %s11, 1
        %s159 = smul.addr %s158, 8
        %s160 = scalar_lea.vmem %s0, %s159
      $region32: #{fm_forward.1} parent=27 // pred_fallthru
        _
    $region28: #{fm_forward.1} parent=5 // pred_fallthru
      _
    %p161 = scmp.le.s32.totalorder 1, %s11
    %p162 = scmp.lt.s32.totalorder %s11, 3
    %p163 = pnand %p161, %p162
    %p164 = pneg %p163
    // Predicated region
    $region33: #{fm_forward.1} parent=5 // pred_check
      _
    $region34: #{fm_forward.1} parent=5 // pred_check_branch
      %166 = sbr.rel (%p163) target = $region36
    $region35: #{fm_forward.1} parent=5 // pred_region
      %s167 = ssub.s32 %s11, 1
      %p168 = scmp.lt.s32.totalorder %s16, 1
      %s169 = scalar_select %p168, %s16, 1
      %s170 = smul.addr %s169, 8
      %s171 = scalar_lea.vmem %s0, %s170
      %p172 = pneg %p37
      %p173 = pneg %p34
      %p174 = pneg %p58
      %p175 = pneg %p55
      %p176 = pneg %p79
      %p177 = pneg %p76
      %p178 = pneg %p100
      %p179 = pneg %p97
      %p180 = pneg %p126
      %p181 = pneg %p123
      %p182 = scmp.lt.s32.totalorder %s16, 1
      %s183 = scalar_select %p182, %s16, 1
      %s184 = smul.addr %s183, 8
      %s185 = scalar_lea.vmem %s4, %s184
      %p186 = scmp.lt.s32.totalorder %s16, 1
      %s187 = scalar_select %p186, %s16, 1
      %s188 = smul.addr %s187, 8
      %s189 = scalar_lea.vmem %s0, %s188
      %p190 = scmp.lt.s32.totalorder %s16, 1
      %s191 = scalar_select %p190, %s16, 1
      %s192 = smul.addr %s191, 8
      %s193 = scalar_lea.vmem %s4, %s192
      %v194 = vld [vmem:[%s189] sm:$0xff]
      %v195 = vld [vmem:[%s1] sm:$0xff]
      %v196 = vld [vmem:[%s1 + $0x8] sm:$0xff]
      %v197 = vld [vmem:[%s1 + $0x10] sm:$0xff]
      %v198 = vld [vmem:[%s1 + $0x18] sm:$0xff]
      %v199 = vld [vmem:[%s2] sm:$0xff]
      %v200 = vld [vmem:[%s2 + $0x8] sm:$0xff]
      %v201 = vld [vmem:[%s2 + $0x10] sm:$0xff]
      %v202 = vld [vmem:[%s2 + $0x18] sm:$0xff]
      %s203 = sld [smem:[#allocation2]]
      %vm204 = vcmask 261120
      %v206 = vsel %vm204, %v194, 0
      %208 = vmatprep.subr.mxu0 0.0
      %209 = vmatpush1.msra.mxu0 %v195
      %210 = vmatprep.subr.mxu0 0.0
      %211 = vmatpush1.msra.mxu0 %v196
      %212 = vmatprep.subr.mxu0 0.0
      %213 = vmatpush1.msra.mxu0 %v197
      %214 = vmatprep.subr.mxu0 0.0
      %215 = vmatpush1.msra.mxu0 %v198
      %216 = vmatprep.subr.mxu0 0.0
      %217 = vmatpush1.msra.mxu0 0.0
      %218 = vmatprep.subr.mxu0 0.0
      %219 = vmatpush1.msra.mxu0 0.0
      %220 = vmatprep.subr.mxu0 0.0
      %221 = vmatpush1.msra.mxu0 0.0
      %222 = vmatprep.subr.mxu0 0.0
      %223 = vmatpush1.msra.mxu0 0.0
      %224 = vmatprep.subr.mxu0 0.0
      %225 = vmatpush1.msra.mxu0 0.0
      %226 = vmatprep.subr.mxu0 0.0
      %227 = vmatpush1.msra.mxu0 0.0
      %228 = vmatprep.subr.mxu0 0.0
      %229 = vmatpush1.msra.mxu0 0.0
      %230 = vmatprep.subr.mxu0 0.0
      %231 = vmatpush1.msra.mxu0 0.0
      %232 = vmatprep.subr.mxu0 0.0
      %233 = vmatpush1.msra.mxu0 0.0
      %234 = vmatprep.subr.mxu0 0.0
      %235 = vmatpush1.msra.mxu0 0.0
      %236 = vmatprep.subr.mxu0 0.0
      %237 = vmatpush1.msra.mxu0 0.0
      %238 = vmatprep.subr.mxu0 0.0
      %239 = vmatpush1.msra.mxu0 0.0
      %240 = vmatprep.subr.mxu0 0.0
      %241 = vmatpush1.msra.mxu0 0.0
      %242 = vmatprep.subr.mxu0 0.0
      %243 = vmatpush1.msra.mxu0 0.0
      %244 = vmatprep.subr.mxu0 0.0
      %245 = vmatpush1.msra.mxu0 0.0
      %246 = vmatprep.subr.mxu0 0.0
      %247 = vmatpush1.msra.mxu0 0.0
      %248 = vmatprep.subr.mxu0 0.0
      %249 = vmatpush1.msra.mxu0 0.0
      %250 = vmatprep.subr.mxu0 0.0
      %251 = vmatpush1.msra.mxu0 0.0
      %252 = vmatprep.subr.mxu0 0.0
      %253 = vmatpush1.msra.mxu0 0.0
      %254 = vmatprep.subr.mxu0 0.0
      %255 = vmatpush1.msra.mxu0 0.0
      %256 = vmatprep.subr.mxu0 0.0
      %257 = vmatpush1.msra.mxu0 0.0
      %258 = vmatprep.subr.mxu0 0.0
      %259 = vmatpush1.msra.mxu0 0.0
      %260 = vmatprep.subr.mxu0 0.0
      %261 = vmatpush1.msra.mxu0 0.0
      %262 = vmatprep.subr.mxu0 0.0
      %263 = vmatpush1.msra.mxu0 0.0
      %264 = vmatprep.subr.mxu0 0.0
      %265 = vmatpush1.msra.mxu0 0.0
      %266 = vmatprep.subr.mxu0 0.0
      %267 = vmatpush1.msra.mxu0 0.0
      %268 = vmatprep.subr.mxu0 0.0
      %269 = vmatpush1.msra.mxu0 0.0
      %270 = vmatprep.subr.mxu0 0.0
      %271 = vmatpush1.msra.mxu0 0.0
      %272 = vmatprep.mubr.f32.mxu0 0.0
      %273 = vmatmul.mubr.f32.gmra.mrb[0].mxu0 %v206
      %v274 = vpop.f32.mrb[0].mxu0
      %v275 = vadd.f32 0.0, %v274
      %v276 = vpop.f32.mrb[0].mxu0
      %277 = vdwg.mxu0
      %v278 = vmul.f32 %v194, %v194
      %v280 = vsel %vm204, %v278, 0
      %282 = vmatprep.subr.mxu0 0.0
      %283 = vmatpush1.msra.mxu0 %v199
      %284 = vmatprep.subr.mxu0 0.0
      %285 = vmatpush1.msra.mxu0 %v200
      %286 = vmatprep.subr.mxu0 0.0
      %287 = vmatpush1.msra.mxu0 %v201
      %288 = vmatprep.subr.mxu0 0.0
      %289 = vmatpush1.msra.mxu0 %v202
      %290 = vmatprep.subr.mxu0 0.0
      %291 = vmatpush1.msra.mxu0 0.0
      %292 = vmatprep.subr.mxu0 0.0
      %293 = vmatpush1.msra.mxu0 0.0
      %294 = vmatprep.subr.mxu0 0.0
      %295 = vmatpush1.msra.mxu0 0.0
      %296 = vmatprep.subr.mxu0 0.0
      %297 = vmatpush1.msra.mxu0 0.0
      %298 = vmatprep.subr.mxu0 0.0
      %299 = vmatpush1.msra.mxu0 0.0
      %300 = vmatprep.subr.mxu0 0.0
      %301 = vmatpush1.msra.mxu0 0.0
      %302 = vmatprep.subr.mxu0 0.0
      %303 = vmatpush1.msra.mxu0 0.0
      %304 = vmatprep.subr.mxu0 0.0
      %305 = vmatpush1.msra.mxu0 0.0
      %306 = vmatprep.subr.mxu0 0.0
      %307 = vmatpush1.msra.mxu0 0.0
      %308 = vmatprep.subr.mxu0 0.0
      %309 = vmatpush1.msra.mxu0 0.0
      %310 = vmatprep.subr.mxu0 0.0
      %311 = vmatpush1.msra.mxu0 0.0
      %312 = vmatprep.subr.mxu0 0.0
      %313 = vmatpush1.msra.mxu0 0.0
      %314 = vmatprep.subr.mxu0 0.0
      %315 = vmatpush1.msra.mxu0 0.0
      %316 = vmatprep.subr.mxu0 0.0
      %317 = vmatpush1.msra.mxu0 0.0
      %318 = vmatprep.subr.mxu0 0.0
      %319 = vmatpush1.msra.mxu0 0.0
      %320 = vmatprep.subr.mxu0 0.0
      %321 = vmatpush1.msra.mxu0 0.0
      %322 = vmatprep.subr.mxu0 0.0
      %323 = vmatpush1.msra.mxu0 0.0
      %324 = vmatprep.subr.mxu0 0.0
      %325 = vmatpush1.msra.mxu0 0.0
      %326 = vmatprep.subr.mxu0 0.0
      %327 = vmatpush1.msra.mxu0 0.0
      %328 = vmatprep.subr.mxu0 0.0
      %329 = vmatpush1.msra.mxu0 0.0
      %330 = vmatprep.subr.mxu0 0.0
      %331 = vmatpush1.msra.mxu0 0.0
      %332 = vmatprep.subr.mxu0 0.0
      %333 = vmatpush1.msra.mxu0 0.0
      %334 = vmatprep.subr.mxu0 0.0
      %335 = vmatpush1.msra.mxu0 0.0
      %336 = vmatprep.subr.mxu0 0.0
      %337 = vmatpush1.msra.mxu0 0.0
      %338 = vmatprep.subr.mxu0 0.0
      %339 = vmatpush1.msra.mxu0 0.0
      %340 = vmatprep.subr.mxu0 0.0
      %341 = vmatpush1.msra.mxu0 0.0
      %342 = vmatprep.subr.mxu0 0.0
      %343 = vmatpush1.msra.mxu0 0.0
      %344 = vmatprep.subr.mxu0 0.0
      %345 = vmatpush1.msra.mxu0 0.0
      %346 = vmatprep.mubr.f32.mxu0 0.0
      %347 = vmatmul.mubr.f32.gmra.mrb[0].mxu0 %v280
      %v348 = vpop.f32.mrb[0].mxu0
      %v349 = vadd.f32 0.0, %v348
      %v350 = vpop.f32.mrb[0].mxu0
      %351 = vdwg.mxu0
      %v352 = vstv %s203
      %v353 = vadd.f32 %v275, %v352
      %v354 = vmul.f32 %v275, %v275
      %v355 = vsub.f32 %v354, %v349
      %vm356 = vcmask 130048
      %v357 = vsel %vm356, %v355, 0.0
      %358 = vadd.xlane.f32.xlu0 %v357
      %v359 = vpop.xlane.xlu0 %358
      %v360 = vmul.f32 %v359, 0.5
      %v361 = vadd.f32 %v353, %v360
      %v362 = vxor.u32 %v361, 2147483648
      %v363 = vmul.f32 %v362, 1.442695
      %v364 = vpow.pop %v363
      %v365 = vadd.f32 %v364, 1.0
      %v366 = vrcp.pop %v365
      %v367 = vmul.f32 1.0, %v366
      %369 = vrot.lane.b32.xlu0 %v367, 112
      %v370 = vpop.permute.xlu0 %369
      %vm372 = vcmask 7168
      %373 = vst.msk [vmem:[%s193] sm:$0xff] %vm372, %v370
      %p374 = scmp.lt.s32.totalorder %s16, 1
      %s375 = scalar_select %p374, %s16, 1
      %s376 = smul.addr %s375, 8
      %s377 = scalar_lea.vmem %s4, %s376
      // Predicated region
      $region37: #{fm_forward.1} parent=35 // pred_check
        %p378 = pneg %p123
      $region38: #{fm_forward.1} parent=35 // pred_check_branch
        %380 = sbr.rel (%p378) target = $region40
      $region39: #{fm_forward.1} parent=35 // pred_region
        _
      $region40: #{fm_forward.1} parent=35 // pred_fallthru
        _
    $region36: #{fm_forward.1} parent=5 // pred_fallthru
      _
    %p381 = scmp.le.s32.totalorder 2, %s11
    // Predicated region
    $region41: #{fm_forward.1} parent=5 // pred_check
      %p382 = pneg %p381
    $region42: #{fm_forward.1} parent=5 // pred_check_branch
      %384 = sbr.rel (%p382) target = $region44
    $region43: #{fm_forward.1} parent=5 // pred_region
      %s385 = ssub.s32 %s11, 2
      // Predicated region
      $region45: #{fm_forward.1} parent=43 // pred_check
        %p386 = pneg %p129
      $region46: #{fm_forward.1} parent=43 // pred_check_branch
        %388 = sbr.rel (%p386) target = $region48
      $region47: #{fm_forward.1} parent=43 // pred_region
        %p389 = scmp.lt.s32.totalorder %s17, 1
        %s390 = scalar_select %p389, %s17, 1
        %s391 = smul.addr %s390, 8
        %s392 = scalar_lea.vmem %s4, %s391
      $region48: #{fm_forward.1} parent=43 // pred_fallthru
        _
    $region44: #{fm_forward.1} parent=5 // pred_fallthru
      _
  $region6: #{fm_forward.1} parent=0 // loop_footer
    %s15 = sadd.s32 1, %s11
  $region7: #{fm_forward.1} parent=0 // loop_footer_branch
    %10 = sbr.rel target = $region3
  $region8: #{fm_forward.1} parent=0 // loop_exit
    _

</llo_original>
